<compile_context>
chip_gen: v5e
topology: v5e:2x2
jax: 0.10.0
libtpu: 0.0.40
codegen_flags: <defaults>
</compile_context>

<pallas_src>
import functools

import jax
import jax.numpy as jnp
from jax.experimental import pallas as pl
from jax.experimental.pallas import tpu as pltpu


def _round_up(x, m):
    return (x + m - 1) // m * m


def _patch_embed_kernel(p_ref, w_ref, b_ref, o_ref):
    # p_ref: (tm, K) bf16 patches, w_ref: (K, tn) bf16, b_ref: (1, tn) f32,
    # o_ref: (tm, tn).  Single un-tiled K pass -> each output tile is written
    # exactly once (no accumulator scratch, no init/finalize phases).
    acc = jnp.dot(p_ref[...], w_ref[...], preferred_element_type=jnp.float32)
    o_ref[...] = (acc + b_ref[...]).astype(o_ref.dtype)


def patch_embed_forward(x, weight, bias, patch_size, *, compute_dtype=jnp.bfloat16):
    """x: (B, C, H, W); weight: (E, C, p, p); bias: (E,). Returns (B, N, E) in x.dtype."""
    B, C, H, W = x.shape
    E = weight.shape[0]
    p = patch_size
    assert H % p == 0 and W % p == 0, "H and W must be divisible by patch_size"
    Hp, Wp = H // p, W // p
    N = Hp * Wp
    K = C * p * p
    M = B * N

    # --- glue: patchify (Conv2d(kernel=stride=p) -> GEMM rows), cast to bf16 --
    # (B, C, Hp, p, Wp, p) -> (B, Hp, Wp, C, p, p) -> (B*N, C*p*p)
    patches = x.reshape(B, C, Hp, p, Wp, p)
    patches = jnp.transpose(patches, (0, 2, 4, 1, 3, 5)).reshape(M, K)
    patches = patches.astype(compute_dtype)

    # Conv weight (E, C, p, p) -> GEMM weight (K, E); bias stays f32.
    w_mat = weight.reshape(E, K).T.astype(compute_dtype)
    b_mat = bias.reshape(1, E).astype(jnp.float32)

    # --- tile sizing ----------------------------------------------------------
    # Lane-dense (multiple-of-128) last dims so stores are unmasked vst.
    # Tiles are sized so the double-buffered working set stays far below the
    # 32 MiB scoped-VMEM default -> full double buffering on v5e/v6e (128 MiB)
    # and on v7x (64 MiB physical).
    K_pad = _round_up(K, 128)
    E_pad = _round_up(E, 128)
    # Keep the whole (K, E) weight + bias resident when E is small (standard
    # ViT: 768x768 bf16 ~ 1.1 MiB -> DMA'd once); otherwise tile E lane-densely.
    if E_pad <= 1024:
        tn = E_pad
    elif E_pad % 256 == 0:
        tn = 256
    else:
        tn = 128
    tm = min(512, _round_up(M, 8))
    M_pad = _round_up(M, tm)

    if (M_pad, K_pad) != (M, K):
        patches = jnp.pad(patches, ((0, M_pad - M), (0, K_pad - K)))
    if (K_pad, E_pad) != (K, E):
        w_mat = jnp.pad(w_mat, ((0, K_pad - K), (0, E_pad - E)))
    if E_pad != E:
        b_mat = jnp.pad(b_mat, ((0, 0), (0, E_pad - E)))

    grid = (M_pad // tm, E_pad // tn)

    cost = pl.CostEstimate(
        flops=2 * M_pad * K_pad * E_pad,
        transcendentals=0,
        bytes_accessed=(
            M_pad * K_pad * patches.dtype.itemsize
            + K_pad * E_pad * w_mat.dtype.itemsize
            + E_pad * b_mat.dtype.itemsize
            + M_pad * E_pad * jnp.dtype(x.dtype).itemsize
        ),
    )

    out = pl.pallas_call(
        _patch_embed_kernel,
        out_shape=jax.ShapeDtypeStruct((M_pad, E_pad), x.dtype),
        grid_spec=pltpu.PrefetchScalarGridSpec(
            num_scalar_prefetch=0,
            grid=grid,
            in_specs=[
                pl.BlockSpec((tm, K_pad), lambda i, j: (i, 0)),  # patch tile (pipelined)
                pl.BlockSpec((K_pad, tn), lambda i, j: (0, j)),  # weight (resident over i)
                pl.BlockSpec((1, tn), lambda i, j: (0, j)),      # bias   (resident over i)
            ],
            out_specs=pl.BlockSpec((tm, tn), lambda i, j: (i, j)),
        ),
        compiler_params=pltpu.CompilerParams(
            # Both grid axes are independent -> shard across v7x's 2 TensorCores.
            dimension_semantics=("parallel", "parallel"),
            vmem_limit_bytes=32 * 1024 * 1024,
            # Let XLA fuse the patchify transpose/reshape/cast into the kernel's
            # first operand to avoid an extra HBM round trip of the patch matrix.
            allow_input_fusion=[True, False, False],
        ),
        cost_estimate=cost,
    )(patches, w_mat, b_mat)

    return out[:M, :E].reshape(B, N, E)


if __name__ == "__main__":
    # Small shapes consistent with the module: img_size=16, patch_size=4,
    # in_chans=4, embed_dim=32, batch=2  ->  num_patches = (16//4)**2 = 16.
    B, C, H, W = 2, 4, 16, 16
    patch_size = 4
    embed_dim = 32

    key = jax.random.PRNGKey(0)
    kx, kw, kb = jax.random.split(key, 3)

    x = jax.random.normal(kx, (B, C, H, W), dtype=jnp.float32)
    weight = jax.random.normal(
        kw, (embed_dim, C, patch_size, patch_size), dtype=jnp.float32) * 0.02
    bias = jax.random.normal(kb, (embed_dim,), dtype=jnp.float32) * 0.02

    fwd = jax.jit(functools.partial(patch_embed_forward, patch_size=patch_size))
    out = fwd(x, weight, bias)
    jax.block_until_ready(out)

    # Reference check vs. plain-JAX f32 strided conv (== PyTorch Conv2d, k=s=p).
    ref = jax.lax.conv_general_dilated(
        x, weight, window_strides=(patch_size, patch_size), padding="VALID",
        dimension_numbers=("NCHW", "OIHW", "NCHW"),
    ) + bias[None, :, None, None]
    ref = jnp.transpose(ref.reshape(B, embed_dim, -1), (0, 2, 1))

    assert out.shape == (B, (H // patch_size) * (W // patch_size), embed_dim)
    # bf16 inputs with f32 accumulation -> relaxed tolerance vs the f32 reference.
    assert jnp.allclose(out, ref, atol=3e-2, rtol=3e-2), float(
        jnp.max(jnp.abs(out - ref)))

    print("KERNEL_OK")
</pallas_src>

<mosaic_0001>
module attributes {stable_mosaic.version = 11 : i64} {
  func.func @_patch_embed_kernel(%arg0: i32, %arg1: i32, %arg2: memref<32x128xbf16, #tpu.memory_space<vmem>>, %arg3: memref<128x128xbf16, #tpu.memory_space<vmem>>, %arg4: memref<1x128xf32, #tpu.memory_space<vmem>>, %arg5: memref<32x128xf32, #tpu.memory_space<vmem>>) attributes {dimension_semantics = [#tpu.dimension_semantics<parallel>, #tpu.dimension_semantics<parallel>], iteration_bounds = array<i64: 1, 1>, scalar_prefetch = 0 : i64, scratch_operands = 0 : i64, tpu.core_type = #tpu.core_type<tc>, window_params = [{transform_indices = @transform_0, window_bounds = array<i64: 32, 128>}, {transform_indices = @transform_1, window_bounds = array<i64: 128, 128>}, {transform_indices = @transform_2, window_bounds = array<i64: 1, 128>}, {transform_indices = @transform_3, window_bounds = array<i64: 32, 128>}]} {
    %c0 = arith.constant 0 : index
    %c0_0 = arith.constant 0 : index
    %0 = vector.load %arg2[%c0, %c0_0] : memref<32x128xbf16, #tpu.memory_space<vmem>>, vector<32x128xbf16>
    %c0_1 = arith.constant 0 : index
    %c0_2 = arith.constant 0 : index
    %1 = vector.load %arg3[%c0_1, %c0_2] : memref<128x128xbf16, #tpu.memory_space<vmem>>, vector<128x128xbf16>
    %cst = arith.constant dense<0.000000e+00> : vector<32x128xf32>
    %2 = tpu.matmul %0, %1, %cst {dimension_numbers = #tpu.dot_dimension_numbers<[1], [0], [0], [1], [0, 0, 1, 1], [], []>} : vector<32x128xbf16>, vector<128x128xbf16>, vector<32x128xf32> -> vector<32x128xf32>
    %c0_3 = arith.constant 0 : index
    %c0_4 = arith.constant 0 : index
    %3 = vector.load %arg4[%c0_3, %c0_4] : memref<1x128xf32, #tpu.memory_space<vmem>>, vector<1x128xf32>
    %4 = vector.broadcast %3 : vector<1x128xf32> to vector<32x128xf32>
    %5 = arith.addf %2, %4 : vector<32x128xf32>
    %c0_5 = arith.constant 0 : index
    %c0_6 = arith.constant 0 : index
    %6 = vector.load %arg5[%c0_5, %c0_6] : memref<32x128xf32, #tpu.memory_space<vmem>>, vector<32x128xf32>
    tpu.vector_store %arg5[%c0_5, %c0_6], %5 {strides = array<i32>} : memref<32x128xf32, #tpu.memory_space<vmem>>, vector<32x128xf32>,
    return
  }
  func.func @transform_0(%arg0: i32, %arg1: i32) -> (i32, i32) {
    %c0_i32 = arith.constant 0 : i32
    %c0_i32_0 = arith.constant 0 : i32
    return %arg0, %c0_i32 : i32, i32
  }
  func.func @transform_1(%arg0: i32, %arg1: i32) -> (i32, i32) {
    %c0_i32 = arith.constant 0 : i32
    %c0_i32_0 = arith.constant 0 : i32
    return %c0_i32, %arg1 : i32, i32
  }
  func.func @transform_2(%arg0: i32, %arg1: i32) -> (i32, i32) {
    %c0_i32 = arith.constant 0 : i32
    %c0_i32_0 = arith.constant 0 : i32
    return %c0_i32, %arg1 : i32, i32
  }
  func.func @transform_3(%arg0: i32, %arg1: i32) -> (i32, i32) {
    %c0_i32 = arith.constant 0 : i32
    return %arg0, %arg1 : i32, i32
  }
}

</mosaic_0001>

<llo_original>
// kernel: patch_embed_forward.2
$region0: #{patch_embed_forward.2}
  #allocation0 [shape = 'u32[]', space=smem, size = 0x4, offset = 0x4, fixed_abs, tag = 'smem constant byte address 0x4 - core index']
  #allocation1 [shape = 'u32[72,128]{1,0:T(1,128)}', space=vmem, size = 0x9000, scoped, tag = 'internal scratch']
  #allocation2 [shape = 'u32[2048]{0}', space=vmem, size = 0x2000, scoped, tag = 'scoped memory for patch_embed_forward.2']
  #allocation3 [shape = 'u32[2048]{0}', space=vmem, size = 0x2000, scoped, tag = 'scoped memory for patch_embed_forward.2']
  #allocation4 [shape = 'u32[2048]{0}', space=vmem, size = 0x2000, scoped, tag = 'scoped memory for patch_embed_forward.2']
  #allocation5 [shape = 'u32[2048]{0}', space=vmem, size = 0x2000, scoped, tag = 'scoped memory for patch_embed_forward.2']
  #allocation6 [shape = 'u32[2048]{0}', space=vmem, size = 0x2000, scoped, tag = 'scoped memory for patch_embed_forward.2']
  %s0 = inlined_call_operand.vmem [shape: bf16[128,128], index: 0, kind: input, shape index: {}]
  %s1 = inlined_call_operand.vmem [shape: f32[1,128], index: 1, kind: input, shape index: {}]
  %s2 = inlined_call_operand.vmem [shape: bf16[32,64], index: 2, kind: input, shape index: {}]
  %s3 = inlined_call_operand.<no memory space> [shape: bf16[], index: 3, kind: input, shape index: {}]
  %s4 = inlined_call_operand.hbm [shape: f32[32,128], index: 4, kind: output, shape index: {}]
  %s5 = sld [smem:[#allocation0]]
  $region22: #{patch_embed_forward.2} parent=0
    _
  %s7 = ssub.s32 1, %s5
  %s8 = scalar_select 0, %s7, %s5
  %v9 = vstv %s3
  %v10 = vunpack.i.l.bf16 %v9
  %v12 = vunpack.i.h.bf16 %v9
  $region1: #{patch_embed_forward.2} parent=0
    #allocation7 [shape = 'u8[16384]{0}', space=vmem, size = 0x4000, scoped, tag = 'output window, operand 0, single buffered']
    #allocation8 [shape = 's32[1]{0}', space=sflag, size = 0x4, scoped, tag = 'scoped memory for patch_embed_forward.2']
    #allocation9 [shape = 'u8[8192]{0}', space=vmem, size = 0x2000, dematerialized = true, scoped, tag = 'FusionAdapter Buffer %fusion.1 = bf16[32,128]{1,0:T(8,128)(2,1)} fusion(%param_2.1, %param_3), kind=kLoop, calls=%fused_computation.2.clone, metadata={op_name="jit(patch_embed_forward)/jit(_pad)/pad" stack_frame_id=12}']
    %14 = vsyncpa [#allocation8], 0
    // Predicated region
    $region2: #{patch_embed_forward.2} parent=1 // pred_check
      _
    $region3: #{patch_embed_forward.2} parent=1 // pred_check_branch
      %16 = sbr.rel (0) target = $region5
    $region4: #{patch_embed_forward.2} parent=1 // pred_region
      _
    $region5: #{patch_embed_forward.2} parent=1 // pred_fallthru
      _
    // Predicated region
    $region6: #{patch_embed_forward.2} parent=1 // pred_check
      _
    $region7: #{patch_embed_forward.2} parent=1 // pred_check_branch
      %18 = sbr.rel (0) target = $region9
    $region8: #{patch_embed_forward.2} parent=1 // pred_region
      _
    $region9: #{patch_embed_forward.2} parent=1 // pred_fallthru
      _
    // Predicated region
    $region10: #{patch_embed_forward.2} parent=1 // pred_check
      _
    $region11: #{patch_embed_forward.2} parent=1 // pred_check_branch
      %20 = sbr.rel (0) target = $region13
    $region12: #{patch_embed_forward.2} parent=1 // pred_region
      _
    $region13: #{patch_embed_forward.2} parent=1 // pred_fallthru
      _
    %s22 = sor.u32 255, 127
    %s23 = sand.u32 %s22, 85
    %s24 = sshrl.u32 %s23, 1
    %s25 = sor.u32 %s23, %s24
    %s26 = sand.u32 51, %s25
    %s27 = sshrl.u32 %s26, 2
    %s28 = sor.u32 %s26, %s27
    %s29 = sand.u32 15, %s28
    %v30 = vld [vmem:[%s2] sm:%s29]
    %v31 = vunpack.c.l.bf16 %v30
    %v32 = vunpack.c.h.bf16 %v30
    %v33 = vlaneseq
    %v34 = vand.u32 %v33, 127
    %vm36 = vcmp.lt.s32.totalorder %v34, 64
    %v37 = vsel %vm36, %v31, %v10
    %v38 = vpack.c.bf16 0.0, %v37
    %s40 = ssub.s32 16, 1
    %41 = vst [vmem:[#allocation9] sm:%s40] %v38
    %s42 = scalar_lea.vmem %s2, 4
    %s44 = sor.u32 255, 127
    %s45 = sand.u32 %s44, 85
    %s46 = sshrl.u32 %s45, 1
    %s47 = sor.u32 %s45, %s46
    %s48 = sand.u32 51, %s47
    %s49 = sshrl.u32 %s48, 2
    %s50 = sor.u32 %s48, %s49
    %s51 = sand.u32 15, %s50
    %v52 = vld [vmem:[%s42] sm:%s51]
    %v53 = vunpack.c.l.bf16 %v52
    %v54 = vunpack.c.h.bf16 %v52
    %v55 = vlaneseq
    %v56 = vand.u32 %v55, 127
    %vm58 = vcmp.lt.s32.totalorder %v56, 64
    %v59 = vsel %vm58, %v53, %v10
    %s60 = scalar_lea.vmem [#allocation9], 4
    %v61 = vpack.c.bf16 0.0, %v59
    %s63 = ssub.s32 16, 1
    %64 = vst [vmem:[%s60] sm:%s63] %v61
    %s65 = scalar_lea.vmem %s2, 8
    %s67 = sor.u32 255, 127
    %s68 = sand.u32 %s67, 85
    %s69 = sshrl.u32 %s68, 1
    %s70 = sor.u32 %s68, %s69
    %s71 = sand.u32 51, %s70
    %s72 = sshrl.u32 %s71, 2
    %s73 = sor.u32 %s71, %s72
    %s74 = sand.u32 15, %s73
    %v75 = vld [vmem:[%s65] sm:%s74]
    %v76 = vunpack.c.l.bf16 %v75
    %v77 = vunpack.c.h.bf16 %v75
    %v78 = vlaneseq
    %v79 = vand.u32 %v78, 127
    %vm81 = vcmp.lt.s32.totalorder %v79, 64
    %v82 = vsel %vm81, %v76, %v10
    %s83 = scalar_lea.vmem [#allocation9], 8
    %v84 = vpack.c.bf16 0.0, %v82
    %s86 = ssub.s32 16, 1
    %87 = vst [vmem:[%s83] sm:%s86] %v84
    %s88 = scalar_lea.vmem %s2, 12
    %s90 = sor.u32 255, 127
    %s91 = sand.u32 %s90, 85
    %s92 = sshrl.u32 %s91, 1
    %s93 = sor.u32 %s91, %s92
    %s94 = sand.u32 51, %s93
    %s95 = sshrl.u32 %s94, 2
    %s96 = sor.u32 %s94, %s95
    %s97 = sand.u32 15, %s96
    %v98 = vld [vmem:[%s88] sm:%s97]
    %v99 = vunpack.c.l.bf16 %v98
    %v100 = vunpack.c.h.bf16 %v98
    %v101 = vlaneseq
    %v102 = vand.u32 %v101, 127
    %vm104 = vcmp.lt.s32.totalorder %v102, 64
    %v105 = vsel %vm104, %v99, %v10
    %s106 = scalar_lea.vmem [#allocation9], 12
    %v107 = vpack.c.bf16 0.0, %v105
    %s109 = ssub.s32 16, 1
    %110 = vst [vmem:[%s106] sm:%s109] %v107
    %v111 = vld [vmem:[#allocation9] sm:$0xf]
    %v112 = vld [vmem:[#allocation9 + $0x4] sm:$0xf]
    %v113 = vld [vmem:[#allocation9 + $0x8] sm:$0xf]
    %v114 = vld [vmem:[#allocation9 + $0xc] sm:$0xf]
    %v115 = vld [vmem:[%s0] sm:$0xf]
    %v116 = vld [vmem:[%s0 + $0x4] sm:$0xf]
    %v117 = vld [vmem:[%s0 + $0x8] sm:$0xf]
    %v118 = vld [vmem:[%s0 + $0xc] sm:$0xf]
    %v119 = vld [vmem:[%s0 + $0x10] sm:$0xf]
    %v120 = vld [vmem:[%s0 + $0x14] sm:$0xf]
    %v121 = vld [vmem:[%s0 + $0x18] sm:$0xf]
    %v122 = vld [vmem:[%s0 + $0x1c] sm:$0xf]
    %v123 = vld [vmem:[%s0 + $0x20] sm:$0xf]
    %v124 = vld [vmem:[%s0 + $0x24] sm:$0xf]
    %v125 = vld [vmem:[%s0 + $0x28] sm:$0xf]
    %v126 = vld [vmem:[%s0 + $0x2c] sm:$0xf]
    %v127 = vld [vmem:[%s0 + $0x30] sm:$0xf]
    %v128 = vld [vmem:[%s0 + $0x34] sm:$0xf]
    %v129 = vld [vmem:[%s0 + $0x38] sm:$0xf]
    %v130 = vld [vmem:[%s0 + $0x3c] sm:$0xf]
    %v131 = vld [vmem:[%s1] sm:$0x1]
    %v133 = vperm.slane %v131, 0
    %v139 = vunpack.c.l.b16 %v111
    %v140 = vunpack.c.l.b16 %v112
    %v141 = vunpack.c.l.b16 %v113
    %v142 = vunpack.c.l.b16 %v114
    %v143 = vpack.c.b16 %v140, %v139
    %v144 = vpack.c.b16 %v142, %v141
    %v163 = vunpack.c.l.b16 %v115
    %v164 = vunpack.c.l.b16 %v116
    %v165 = vunpack.c.l.b16 %v117
    %v166 = vunpack.c.l.b16 %v118
    %v167 = vunpack.c.l.b16 %v119
    %v168 = vunpack.c.l.b16 %v120
    %v169 = vunpack.c.l.b16 %v121
    %v170 = vunpack.c.l.b16 %v122
    %v171 = vunpack.c.l.b16 %v123
    %v172 = vunpack.c.l.b16 %v124
    %v173 = vunpack.c.l.b16 %v125
    %v174 = vunpack.c.l.b16 %v126
    %v175 = vunpack.c.l.b16 %v127
    %v176 = vunpack.c.l.b16 %v128
    %v177 = vunpack.c.l.b16 %v129
    %v178 = vunpack.c.l.b16 %v130
    %v179 = vpack.c.b16 %v164, %v163
    %v180 = vpack.c.b16 %v166, %v165
    %v181 = vpack.c.b16 %v168, %v167
    %v182 = vpack.c.b16 %v170, %v169
    %v183 = vpack.c.b16 %v172, %v171
    %v184 = vpack.c.b16 %v174, %v173
    %v185 = vpack.c.b16 %v176, %v175
    %v186 = vpack.c.b16 %v178, %v177
    %195 = vmatpush.bf16.msra.mxu0 %v186
    %196 = vmatpush.bf16.msra.mxu0 %v185
    %197 = vmatpush.bf16.msra.mxu0 %v184
    %198 = vmatpush.bf16.msra.mxu0 %v183
    %199 = vmatpush.bf16.msra.mxu0 %v182
    %200 = vmatpush.bf16.msra.mxu0 %v181
    %201 = vmatpush.bf16.msra.mxu0 %v180
    %202 = vmatpush.bf16.msra.mxu0 %v179
    %203 = vmatmul.bf16.gmra.mxu0 %v143
    %v204 = vpop.f32.mrf.mxu0
    %v205 = vadd.f32 %v133, %v204
    %v206 = vpop.f32.mrf.mxu0
    %v207 = vadd.f32 %v133, %v206
    %208 = vmatmul.bf16.gmra.mxu0 %v144
    %v209 = vpop.f32.mrf.mxu0
    %v210 = vadd.f32 %v133, %v209
    %v211 = vpop.f32.mrf.mxu0
    %v212 = vadd.f32 %v133, %v211
    %213 = vdwg.mxu0
    %214 = vst [vmem:[#allocation7] sm:$0xff] %v205
    %215 = vst [vmem:[#allocation7 + $0x8] sm:$0xff] %v207
    %216 = vst [vmem:[#allocation7 + $0x10] sm:$0xff] %v210
    %217 = vst [vmem:[#allocation7 + $0x18] sm:$0xff] %v212
    // Predicated region
    $region14: #{patch_embed_forward.2} parent=1 // pred_check
      _
    $region15: #{patch_embed_forward.2} parent=1 // pred_check_branch
      %219 = sbr.rel (0) target = $region17
    $region16: #{patch_embed_forward.2} parent=1 // pred_region
      %221 = vsyncadd [#allocation8], 0
      %s222 = sshll.u32 [#allocation7], 4
      %s223 = int_to_ptr.vmem [resolvable:$true] %s222
      %s224 = sshll.u32 %s4, 4
      %s225 = int_to_ptr.hbm [resolvable:$true] %s224
      %230 = dma.vmem_to_hbm [thread:$0]  %s223, 512, %s225, [#allocation8], 128, 128, 8
    $region17: #{patch_embed_forward.2} parent=1 // pred_fallthru
      _
    // Predicated region
    $region18: #{patch_embed_forward.2} parent=1 // pred_check
      _
    $region19: #{patch_embed_forward.2} parent=1 // pred_check_branch
      %232 = sbr.rel (0) target = $region21
    $region20: #{patch_embed_forward.2} parent=1 // pred_region
      %234 = dma.done [#allocation8], 512
    $region21: #{patch_embed_forward.2} parent=1 // pred_fallthru
      _
    %235 = vsyncpa [#allocation8], 1

</llo_original>
